<compile_context>
chip_gen: v7x
topology: tpu7x:2x2x1
jax: 0.10.0
libtpu: 0.0.40
codegen_flags: <defaults>
</compile_context>

<pallas_src>
import functools
import math

import jax
import jax.numpy as jnp
from jax import lax
from jax.experimental import pallas as pl
from jax.experimental.pallas import tpu as pltpu


# ----------------------- parameter-prep glue (plain JAX) -----------------------

def _quantize_k(x, k):
    n = float(2 ** k - 1)
    return jnp.round(x * n) / n


def dorefa_weight_quant(w, w_bit):
    # TODO(synk): Conv2d_Q source not provided; assuming standard DoReFa-style weight quant.
    if w_bit >= 32:
        return w
    wt = jnp.tanh(w)
    m = jnp.maximum(jnp.max(jnp.abs(wt)), 1e-12)   # guard all-zero weights (NaN otherwise)
    wt = wt / (2.0 * m) + 0.5
    return 2.0 * _quantize_k(wt, w_bit) - 1.0


def _banded_weights(wq, KH, KW, Cin, Cout, Wout, Wp):
    """Fold the kw shift + Cin->Cout mix into KH banded (Toeplitz-like) matrices.

    band[kh, u*Cin + cin, w*Cout + co] = wq[co, cin, kh, u - w]  if 0 <= u - w < KW
                                       = 0                       otherwise
    so that  conv contribution of kernel row kh = x_fused[kh:kh+Hout, :] @ band[kh]
    is a single lane-dense matmul whose result is already in (Hout, Wout*Cout) layout.
    Size is KH * Wp*Cin * Wout*Cout (Wout x the dense weights) -- tiny for small W.
    """
    w_khw = jnp.transpose(wq, (2, 3, 1, 0))                 # (KH, KW, Cin, Cout)
    u = jnp.arange(Wp)[:, None]                             # (Wp, 1)
    w = jnp.arange(Wout)[None, :]                           # (1, Wout)
    kw_idx = u - w                                          # (Wp, Wout)
    valid = (kw_idx >= 0) & (kw_idx < KW)
    kw_c = jnp.clip(kw_idx, 0, KW - 1)
    taps = w_khw[:, kw_c, :, :]                             # (KH, Wp, Wout, Cin, Cout)
    taps = taps * valid[None, :, :, None, None].astype(taps.dtype)
    band = jnp.transpose(taps, (0, 1, 3, 2, 4)).reshape(KH, Wp * Cin, Wout * Cout)
    return band


# ------------------------------- Pallas kernels ---------------------------------

def conv_stats_kernel(x_ref, w_ref, y_ref, sum_ref, sq_ref, *, KH, Hout, TB):
    """Stride-1 conv (KH lane-dense matmuls/image) + per-image BN partial statistics.

    x_ref:   (TB, Hp, Wp*Cin)         padded images, W fused with Cin, bf16
    w_ref:   (KH, Wp*Cin, Wout*Cout)  banded conv weights, bf16
    y_ref:   (TB, Hout, Wout*Cout)    conv output (lane-dense), f32
    sum_ref: (TB, 1, Wout*Cout)       per-image channel sums over H, f32
    sq_ref:  (TB, 1, Wout*Cout)       per-image channel sum-of-squares over H, f32
    """
    for b in range(TB):                       # static unroll; TB is small
        acc = jnp.dot(x_ref[b, 0:Hout, :], w_ref[0],
                      preferred_element_type=jnp.float32)
        for kh in range(1, KH):
            acc = acc + jnp.dot(x_ref[b, kh:kh + Hout, :], w_ref[kh],
                                preferred_element_type=jnp.float32)
        y_ref[b] = acc
        sum_ref[b] = jnp.sum(acc, axis=0, keepdims=True)
        sq_ref[b] = jnp.sum(acc * acc, axis=0, keepdims=True)


def bn_quant_kernel(y_ref, scale_ref, bias_ref, o_ref, *, a_bit, scale_coef):
    """Folded BatchNorm affine + PACT-style activation quantization (lane-dense).

    y_ref/o_ref: (N*Hout, Wout*Cout) f32; scale_ref/bias_ref: (1, Wout*Cout) f32.
    """
    # TODO(synk): ActQuant source not provided; assuming PACT-style clamp + uniform rounding.
    y = y_ref[...] * scale_ref[...] + bias_ref[...]
    levels = float(2 ** a_bit - 1)
    yc = jnp.clip(y, 0.0, scale_coef)
    q = jnp.round(yc * (levels / scale_coef)) * (scale_coef / levels)
    o_ref[...] = q.astype(o_ref.dtype)


# --------------------------------- wrapper -------------------------------------

def conv_norm_forward(x_nchw, w_oihw, gamma, beta, *, a_bit, w_bit,
                      stride=1, dilation=1, groups=1,
                      scale_coef=6.0, eps=1e-5, batch_tile=1):
    assert stride == 1 and dilation == 1 and groups == 1, \
        "synthetic instance uses stride=1, dilation=1, groups=1"
    N, Cin, H, W = x_nchw.shape
    Cout, Cin_w, KH, KW = w_oihw.shape
    assert Cin_w == Cin
    assert N % batch_tile == 0
    TB = batch_tile

    # Same padding rule as the PyTorch module; output size from the conv formula.
    pad = int(math.ceil((dilation * (KH - 1) + 1 - stride) / 2.0))
    Hout = H + 2 * pad - dilation * (KH - 1)
    Wout = W + 2 * pad - dilation * (KW - 1)
    Hp, Wp = H + 2 * pad, W + 2 * pad
    C = Wout * Cout                    # lane-dense last dim everywhere downstream

    # ---- parameter prep (once): DoReFa quant -> banded per-row matrices, bf16 ----
    wq = dorefa_weight_quant(w_oihw.astype(jnp.float32), w_bit)
    w_band = _banded_weights(wq, KH, KW, Cin, Cout, Wout, Wp).astype(jnp.bfloat16)

    # NCHW -> NHWC, pad, fuse W with Cin (free row-major reshape), cast to bf16 once.
    # TODO(synk): keeping the surrounding model channels-last end-to-end would drop this
    # transpose and the final output transpose (2 full HBM passes at this size).
    # TODO(synk): the zero padding could be folded into the kernel (zero-init VMEM scratch
    # + manual DMA of the interior) to save another HBM pass over x.
    x = jnp.transpose(x_nchw, (0, 2, 3, 1)).astype(jnp.bfloat16)
    xp = jnp.pad(x, ((0, 0), (pad, pad), (pad, pad), (0, 0)))
    xf = xp.reshape(N, Hp, Wp * Cin)

    # ------------- pass 1: conv + partial BN stats, grid over image tiles -----------
    k1 = functools.partial(conv_stats_kernel, KH=KH, Hout=Hout, TB=TB)
    y1, s1, s2 = pl.pallas_call(
        k1,
        out_shape=[
            jax.ShapeDtypeStruct((N, Hout, C), jnp.float32),
            jax.ShapeDtypeStruct((N, 1, C), jnp.float32),
            jax.ShapeDtypeStruct((N, 1, C), jnp.float32),
        ],
        grid=(N // TB,),
        in_specs=[
            pl.BlockSpec((TB, Hp, Wp * Cin), lambda n: (n, 0, 0)),
            pl.BlockSpec((KH, Wp * Cin, C), lambda n: (0, 0, 0)),
        ],
        out_specs=[
            pl.BlockSpec((TB, Hout, C), lambda n: (n, 0, 0)),
            pl.BlockSpec((TB, 1, C), lambda n: (n, 0, 0)),
            pl.BlockSpec((TB, 1, C), lambda n: (n, 0, 0)),
        ],
        compiler_params=pltpu.CompilerParams(
            dimension_semantics=("parallel",)),
    )(xf, w_band)

    # ---- tiny per-channel fold: batch stats -> folded BN scale/bias (plain JAX) ----
    cnt = float(N * Hout * Wout)
    ch_sum = jnp.sum(s1, axis=(0, 1)).reshape(Wout, Cout).sum(axis=0)   # (Cout,)
    ch_sq = jnp.sum(s2, axis=(0, 1)).reshape(Wout, Cout).sum(axis=0)
    mean = ch_sum / cnt
    var = jnp.maximum(ch_sq / cnt - mean * mean, 0.0)      # biased var (BN normalization)
    inv = lax.rsqrt(var + eps)
    scale = gamma.astype(jnp.float32) * inv
    bias = beta.astype(jnp.float32) - mean * scale
    # Lane m = w*Cout + co -> per-channel scale[co]; tiled so pass 2 stays lane-dense.
    scale_t = jnp.tile(scale, Wout).reshape(1, C)
    bias_t = jnp.tile(bias, Wout).reshape(1, C)
    # TODO(synk): BatchNorm2d running_mean/running_var not updated (training-mode
    # normalization only); eval-mode parity needs them tracked.

    # -------- pass 2: folded BN + ActQuant, one lane-dense block, one launch --------
    yd = y1.reshape(N * Hout, C)                           # free row-major reshape
    k2 = functools.partial(bn_quant_kernel, a_bit=a_bit, scale_coef=float(scale_coef))
    out2 = pl.pallas_call(
        k2,
        out_shape=jax.ShapeDtypeStruct((N * Hout, C), jnp.float32),
        grid=(1,),
        in_specs=[
            pl.BlockSpec((N * Hout, C), lambda i: (0, 0)),
            pl.BlockSpec((1, C), lambda i: (0, 0)),
            pl.BlockSpec((1, C), lambda i: (0, 0)),
        ],
        out_specs=pl.BlockSpec((N * Hout, C), lambda i: (0, 0)),
        compiler_params=pltpu.CompilerParams(
            dimension_semantics=("arbitrary",)),
    )(yd, scale_t, bias_t)

    # (N*Hout, Wout*Cout) -> NHWC -> NCHW (to match the PyTorch module interface).
    out = out2.reshape(N, Hout, Wout, Cout)
    return jnp.transpose(out, (0, 3, 1, 2))


# ----------------------------------- main ---------------------------------------

if __name__ == "__main__":
    key = jax.random.PRNGKey(0)
    kx, kw = jax.random.split(key)

    # ConvNorm(aout_bit=4, w_bit=4, C_in=4, C_out=8, kernel_size=3, stride=1)
    N, Cin, H, W = 2, 4, 16, 16
    Cout, KH, KW = 8, 3, 3
    a_bit, w_bit = 4, 4

    x = jax.random.normal(kx, (N, Cin, H, W), dtype=jnp.float32)
    w = 0.1 * jax.random.normal(kw, (Cout, Cin, KH, KW), dtype=jnp.float32)
    gamma = jnp.ones((Cout,), dtype=jnp.float32)   # BatchNorm2d default init
    beta = jnp.zeros((Cout,), dtype=jnp.float32)

    fwd = jax.jit(conv_norm_forward,
                  static_argnames=("a_bit", "w_bit", "stride", "dilation",
                                   "groups", "scale_coef", "eps", "batch_tile"))
    y = fwd(x, w, gamma, beta, a_bit=a_bit, w_bit=w_bit)
    jax.block_until_ready(y)

    assert y.shape == (N, Cout, H, W)
    assert bool(jnp.all(jnp.isfinite(y)))
    assert bool(jnp.all((y >= 0.0) & (y <= 6.0)))   # quantized activation range
    print("KERNEL_OK")
</pallas_src>

<mosaic_0001>
module attributes {stable_mosaic.version = 11 : i64} {
  func.func @conv_stats_kernel(%arg0: i32, %arg1: memref<1x18x72xbf16, #tpu.memory_space<vmem>>, %arg2: memref<3x72x128xbf16, #tpu.memory_space<vmem>>, %arg3: memref<1x16x128xf32, #tpu.memory_space<vmem>>, %arg4: memref<1x1x128xf32, #tpu.memory_space<vmem>>, %arg5: memref<1x1x128xf32, #tpu.memory_space<vmem>>) attributes {dimension_semantics = [#tpu.dimension_semantics<parallel>], iteration_bounds = array<i64: 2>, scalar_prefetch = 0 : i64, scratch_operands = 0 : i64, tpu.core_type = #tpu.core_type<tc>, window_params = [{transform_indices = @transform_0, window_bounds = array<i64: 1, 18, 72>}, {pipeline_mode = #tpu.pipeline_mode<synchronous>, transform_indices = @transform_1, window_bounds = array<i64: 3, 72, 128>}, {transform_indices = @transform_2, window_bounds = array<i64: 1, 16, 128>}, {transform_indices = @transform_3, window_bounds = array<i64: 1, 1, 128>}, {transform_indices = @transform_4, window_bounds = array<i64: 1, 1, 128>}]} {
    %c0 = arith.constant 0 : index
    %c0_0 = arith.constant 0 : index
    %c0_1 = arith.constant 0 : index
    %0 = vector.load %arg1[%c0, %c0_0, %c0_1] : memref<1x18x72xbf16, #tpu.memory_space<vmem>>, vector<1x16x72xbf16>
    %1 = vector.shape_cast %0 : vector<1x16x72xbf16> to vector<16x72xbf16>
    %c0_2 = arith.constant 0 : index
    %c0_3 = arith.constant 0 : index
    %c0_4 = arith.constant 0 : index
    %2 = vector.load %arg2[%c0_2, %c0_3, %c0_4] : memref<3x72x128xbf16, #tpu.memory_space<vmem>>, vector<1x72x128xbf16>
    %3 = vector.shape_cast %2 : vector<1x72x128xbf16> to vector<72x128xbf16>
    %cst = arith.constant dense<0.000000e+00> : vector<16x128xf32>
    %4 = tpu.matmul %1, %3, %cst {dimension_numbers = #tpu.dot_dimension_numbers<[1], [0], [0], [1], [0, 0, 1, 1], [], []>} : vector<16x72xbf16>, vector<72x128xbf16>, vector<16x128xf32> -> vector<16x128xf32>
    %c0_5 = arith.constant 0 : index
    %c1 = arith.constant 1 : index
    %c0_6 = arith.constant 0 : index
    %5 = vector.load %arg1[%c0_5, %c1, %c0_6] : memref<1x18x72xbf16, #tpu.memory_space<vmem>>, vector<1x16x72xbf16>
    %6 = vector.shape_cast %5 : vector<1x16x72xbf16> to vector<16x72xbf16>
    %c1_7 = arith.constant 1 : index
    %c0_8 = arith.constant 0 : index
    %c0_9 = arith.constant 0 : index
    %7 = vector.load %arg2[%c1_7, %c0_8, %c0_9] : memref<3x72x128xbf16, #tpu.memory_space<vmem>>, vector<1x72x128xbf16>
    %8 = vector.shape_cast %7 : vector<1x72x128xbf16> to vector<72x128xbf16>
    %cst_10 = arith.constant dense<0.000000e+00> : vector<16x128xf32>
    %9 = tpu.matmul %6, %8, %cst_10 {dimension_numbers = #tpu.dot_dimension_numbers<[1], [0], [0], [1], [0, 0, 1, 1], [], []>} : vector<16x72xbf16>, vector<72x128xbf16>, vector<16x128xf32> -> vector<16x128xf32>
    %10 = arith.addf %4, %9 : vector<16x128xf32>
    %c0_11 = arith.constant 0 : index
    %c2 = arith.constant 2 : index
    %c0_12 = arith.constant 0 : index
    %11 = vector.load %arg1[%c0_11, %c2, %c0_12] : memref<1x18x72xbf16, #tpu.memory_space<vmem>>, vector<1x16x72xbf16>
    %12 = vector.shape_cast %11 : vector<1x16x72xbf16> to vector<16x72xbf16>
    %c2_13 = arith.constant 2 : index
    %c0_14 = arith.constant 0 : index
    %c0_15 = arith.constant 0 : index
    %13 = vector.load %arg2[%c2_13, %c0_14, %c0_15] : memref<3x72x128xbf16, #tpu.memory_space<vmem>>, vector<1x72x128xbf16>
    %14 = vector.shape_cast %13 : vector<1x72x128xbf16> to vector<72x128xbf16>
    %cst_16 = arith.constant dense<0.000000e+00> : vector<16x128xf32>
    %15 = tpu.matmul %12, %14, %cst_16 {dimension_numbers = #tpu.dot_dimension_numbers<[1], [0], [0], [1], [0, 0, 1, 1], [], []>} : vector<16x72xbf16>, vector<72x128xbf16>, vector<16x128xf32> -> vector<16x128xf32>
    %16 = arith.addf %10, %15 : vector<16x128xf32>
    %c0_17 = arith.constant 0 : index
    %c0_18 = arith.constant 0 : index
    %c0_19 = arith.constant 0 : index
    %17 = vector.load %arg3[%c0_17, %c0_18, %c0_19] : memref<1x16x128xf32, #tpu.memory_space<vmem>>, vector<1x16x128xf32>
    %18 = vector.shape_cast %17 : vector<1x16x128xf32> to vector<16x128xf32>
    %19 = vector.shape_cast %16 : vector<16x128xf32> to vector<1x16x128xf32>
    tpu.vector_store %arg3[%c0_17, %c0_18, %c0_19], %19 {strides = array<i32>} : memref<1x16x128xf32, #tpu.memory_space<vmem>>, vector<1x16x128xf32>,
    %cst_20 = arith.constant dense<0.000000e+00> : vector<128xf32>
    %20 = vector.multi_reduction <add>, %16, %cst_20 [0] : vector<16x128xf32> to vector<128xf32>
    %21 = vector.shape_cast %20 : vector<128xf32> to vector<1x128xf32>
    %c0_21 = arith.constant 0 : index
    %c0_22 = arith.constant 0 : index
    %c0_23 = arith.constant 0 : index
    %22 = vector.load %arg4[%c0_21, %c0_22, %c0_23] : memref<1x1x128xf32, #tpu.memory_space<vmem>>, vector<1x1x128xf32>
    %23 = vector.shape_cast %22 : vector<1x1x128xf32> to vector<1x128xf32>
    %24 = vector.shape_cast %21 : vector<1x128xf32> to vector<1x1x128xf32>
    tpu.vector_store %arg4[%c0_21, %c0_22, %c0_23], %24 {strides = array<i32>} : memref<1x1x128xf32, #tpu.memory_space<vmem>>, vector<1x1x128xf32>,
    %25 = arith.mulf %16, %16 : vector<16x128xf32>
    %cst_24 = arith.constant dense<0.000000e+00> : vector<128xf32>
    %26 = vector.multi_reduction <add>, %25, %cst_24 [0] : vector<16x128xf32> to vector<128xf32>
    %27 = vector.shape_cast %26 : vector<128xf32> to vector<1x128xf32>
    %c0_25 = arith.constant 0 : index
    %c0_26 = arith.constant 0 : index
    %c0_27 = arith.constant 0 : index
    %28 = vector.load %arg5[%c0_25, %c0_26, %c0_27] : memref<1x1x128xf32, #tpu.memory_space<vmem>>, vector<1x1x128xf32>
    %29 = vector.shape_cast %28 : vector<1x1x128xf32> to vector<1x128xf32>
    %30 = vector.shape_cast %27 : vector<1x128xf32> to vector<1x1x128xf32>
    tpu.vector_store %arg5[%c0_25, %c0_26, %c0_27], %30 {strides = array<i32>} : memref<1x1x128xf32, #tpu.memory_space<vmem>>, vector<1x1x128xf32>,
    return
  }
  func.func @transform_0(%arg0: i32) -> (i32, i32, i32) {
    %c0_i32 = arith.constant 0 : i32
    %c0_i32_0 = arith.constant 0 : i32
    %c0_i32_1 = arith.constant 0 : i32
    return %arg0, %c0_i32, %c0_i32_0 : i32, i32, i32
  }
  func.func @transform_1(%arg0: i32) -> (i32, i32, i32) {
    %c0_i32 = arith.constant 0 : i32
    %c0_i32_0 = arith.constant 0 : i32
    %c0_i32_1 = arith.constant 0 : i32
    %c0_i32_2 = arith.constant 0 : i32
    return %c0_i32, %c0_i32_0, %c0_i32_1 : i32, i32, i32
  }
  func.func @transform_2(%arg0: i32) -> (i32, i32, i32) {
    %c0_i32 = arith.constant 0 : i32
    %c0_i32_0 = arith.constant 0 : i32
    %c0_i32_1 = arith.constant 0 : i32
    return %arg0, %c0_i32, %c0_i32_0 : i32, i32, i32
  }
  func.func @transform_3(%arg0: i32) -> (i32, i32, i32) {
    %c0_i32 = arith.constant 0 : i32
    %c0_i32_0 = arith.constant 0 : i32
    %c0_i32_1 = arith.constant 0 : i32
    return %arg0, %c0_i32, %c0_i32_0 : i32, i32, i32
  }
  func.func @transform_4(%arg0: i32) -> (i32, i32, i32) {
    %c0_i32 = arith.constant 0 : i32
    %c0_i32_0 = arith.constant 0 : i32
    %c0_i32_1 = arith.constant 0 : i32
    return %arg0, %c0_i32, %c0_i32_0 : i32, i32, i32
  }
}

module attributes {stable_mosaic.version = 11 : i64} {
  func.func @bn_quant_kernel(%arg0: i32, %arg1: memref<32x128xf32, #tpu.memory_space<vmem>>, %arg2: memref<1x128xf32, #tpu.memory_space<vmem>>, %arg3: memref<1x128xf32, #tpu.memory_space<vmem>>, %arg4: memref<32x128xf32, #tpu.memory_space<vmem>>) attributes {dimension_semantics = [#tpu.dimension_semantics<arbitrary>], iteration_bounds = array<i64: 1>, scalar_prefetch = 0 : i64, scratch_operands = 0 : i64, tpu.core_type = #tpu.core_type<tc>, window_params = [{pipeline_mode = #tpu.pipeline_mode<synchronous>, transform_indices = @transform_0, window_bounds = array<i64: 32, 128>}, {pipeline_mode = #tpu.pipeline_mode<synchronous>, transform_indices = @transform_1, window_bounds = array<i64: 1, 128>}, {pipeline_mode = #tpu.pipeline_mode<synchronous>, transform_indices = @transform_2, window_bounds = array<i64: 1, 128>}, {pipeline_mode = #tpu.pipeline_mode<synchronous>, transform_indices = @transform_3, window_bounds = array<i64: 32, 128>}]} {
    %c0 = arith.constant 0 : index
    %c0_0 = arith.constant 0 : index
    %0 = vector.load %arg1[%c0, %c0_0] : memref<32x128xf32, #tpu.memory_space<vmem>>, vector<32x128xf32>
    %c0_1 = arith.constant 0 : index
    %c0_2 = arith.constant 0 : index
    %1 = vector.load %arg2[%c0_1, %c0_2] : memref<1x128xf32, #tpu.memory_space<vmem>>, vector<1x128xf32>
    %2 = vector.broadcast %1 : vector<1x128xf32> to vector<32x128xf32>
    %3 = arith.mulf %0, %2 : vector<32x128xf32>
    %c0_3 = arith.constant 0 : index
    %c0_4 = arith.constant 0 : index
    %4 = vector.load %arg3[%c0_3, %c0_4] : memref<1x128xf32, #tpu.memory_space<vmem>>, vector<1x128xf32>
    %5 = vector.broadcast %4 : vector<1x128xf32> to vector<32x128xf32>
    %6 = arith.addf %3, %5 : vector<32x128xf32>
    %cst = arith.constant 0.000000e+00 : f32
    %cst_5 = arith.constant 6.000000e+00 : f32
    %7 = vector.broadcast %cst : f32 to vector<32x128xf32>
    %8 = arith.maximumf %7, %6 : vector<32x128xf32>
    %9 = vector.broadcast %cst_5 : f32 to vector<32x128xf32>
    %10 = arith.minimumf %9, %8 : vector<32x128xf32>
    %cst_6 = arith.constant 2.500000e+00 : f32
    %11 = vector.broadcast %cst_6 : f32 to vector<32x128xf32>
    %12 = arith.mulf %10, %11 : vector<32x128xf32>
    %13 = math.roundeven %12 : vector<32x128xf32>
    %cst_7 = arith.constant 4.000000e-01 : f32
    %14 = vector.broadcast %cst_7 : f32 to vector<32x128xf32>
    %15 = arith.mulf %13, %14 : vector<32x128xf32>
    %c0_8 = arith.constant 0 : index
    %c0_9 = arith.constant 0 : index
    %16 = vector.load %arg4[%c0_8, %c0_9] : memref<32x128xf32, #tpu.memory_space<vmem>>, vector<32x128xf32>
    tpu.vector_store %arg4[%c0_8, %c0_9], %15 {strides = array<i32>} : memref<32x128xf32, #tpu.memory_space<vmem>>, vector<32x128xf32>,
    return
  }
  func.func @transform_0(%arg0: i32) -> (i32, i32) {
    %c0_i32 = arith.constant 0 : i32
    %c0_i32_0 = arith.constant 0 : i32
    %c0_i32_1 = arith.constant 0 : i32
    return %c0_i32, %c0_i32_0 : i32, i32
  }
  func.func @transform_1(%arg0: i32) -> (i32, i32) {
    %c0_i32 = arith.constant 0 : i32
    %c0_i32_0 = arith.constant 0 : i32
    %c0_i32_1 = arith.constant 0 : i32
    return %c0_i32, %c0_i32_0 : i32, i32
  }
  func.func @transform_2(%arg0: i32) -> (i32, i32) {
    %c0_i32 = arith.constant 0 : i32
    %c0_i32_0 = arith.constant 0 : i32
    %c0_i32_1 = arith.constant 0 : i32
    return %c0_i32, %c0_i32_0 : i32, i32
  }
  func.func @transform_3(%arg0: i32) -> (i32, i32) {
    %c0_i32 = arith.constant 0 : i32
    %c0_i32_0 = arith.constant 0 : i32
    %c0_i32_1 = arith.constant 0 : i32
    return %c0_i32, %c0_i32_0 : i32, i32
  }
}

</mosaic_0001>

<llo_original>
// kernel: conv_norm_forward.2
$region0: #{conv_norm_forward.2}
  #allocation0 [shape = 'u32[]', space=smem, size = 0x4, offset = 0x4, fixed_abs, tag = 'smem constant byte address 0x4 - core index']
  #allocation1 [shape = 'u32[144,128]{1,0:T(1,128)}', space=vmem, size = 0x12000, scoped, tag = 'internal scratch']
  %s0 = inlined_call_operand.vmem [shape: bf16[2,18,72], index: 0, kind: input, shape index: {}]
  %s1 = inlined_call_operand.vmem [shape: bf16[3,72,128], index: 1, kind: input, shape index: {}]
  %s2 = inlined_call_operand.vmem [shape: f32[2,16,128], index: 2, kind: output, shape index: {0}]
  %s3 = inlined_call_operand.vmem [shape: f32[2,1,128], index: 3, kind: output, shape index: {1}]
  %s4 = inlined_call_operand.vmem [shape: f32[2,1,128], index: 4, kind: output, shape index: {2}]
  %5 = xla_tuple %s2, %s3, %s4
  %s6 = sld [smem:[#allocation0]]
  $region57: #{conv_norm_forward.2} parent=0
    _
  %s8 = ssub.s32 1, %s6
  %s9 = scalar_select 0, %s8, %s6
  loop: start=0, step=1, limit=4
  $region2: #{conv_norm_forward.2} parent=0 // loop_pre_header
    _
  $region3: #{conv_norm_forward.2} parent=0 // loop_header
    %s11 = sphi 0, %s15
    %p12 = scmp.ge.s32.totalorder %s11, 4
    %s21 = sphi 0, %s23
    %s24 = sphi 0, %s21
    %s25 = sphi 0, %s24
    %s41 = sphi 0, %s25
    %s45 = sphi 0, %s45
    %s47 = sphi 0, %s45
    %s48 = sphi 0, %s47
    %s62 = sphi 0, %s48
    %s68 = sphi 0, %s70
    %s71 = sphi 0, %s68
    %s72 = sphi 0, %s71
    %s88 = sphi 0, %s72
    %s94 = sphi 0, %s96
    %s97 = sphi 0, %s94
    %s98 = sphi 0, %s97
    %s114 = sphi 0, %s98
    %s120 = sphi 0, %s122
    %s123 = sphi 0, %s120
    %s124 = sphi 0, %s123
    %s140 = sphi 0, %s124
  $region4: #{conv_norm_forward.2} parent=0 // loop_header_branch
    %14 = sbr.rel (%p12) target = $region8
  $region5: #{conv_norm_forward.2} parent=0 // loop_body
    %s16 = ssub.s32 %s11, 1
    %s17 = ssub.s32 %s11, 2
    %s18 = sadd.s32 %s11, 1
    %s19 = ssub.s32 %s11, %s18
    %p20 = scmp.eq.s32.totalorder %s19, 0
    %s22 = sadd.s32 %s21, 1
    %s23 = scalar_select %p20, %s21, %s22
    %p26 = pneg %p20
    %p27 = scmp.eq.s32.totalorder %s11, 1
    %p28 = por %p26, %p27
    %p29 = scmp.ne.s32.totalorder %s21, %s24
    %p30 = scmp.eq.s32.totalorder %s11, 0
    %p31 = por %p29, %p30
    %p32 = scmp.ne.s32.totalorder %s21, %s24
    %p33 = scmp.eq.s32.totalorder %s16, 1
    %p34 = por %p32, %p33
    %p35 = scmp.ne.s32.totalorder %s24, %s25
    %p36 = scmp.eq.s32.totalorder %s16, 0
    %p37 = por %p35, %p36
    %p38 = scmp.ne.s32.totalorder %s24, %s25
    %p39 = scmp.eq.s32.totalorder %s17, 1
    %p40 = por %p38, %p39
    %p42 = scmp.ne.s32.totalorder %s25, %s41
    %p43 = scmp.eq.s32.totalorder %s17, 0
    %p44 = por %p42, %p43
    %s46 = sadd.s32 %s45, 1
    %p49 = scmp.eq.s32.totalorder %s11, 1
    %p50 = scmp.ne.s32.totalorder %s45, %s47
    %p51 = scmp.eq.s32.totalorder %s11, 0
    %p52 = por %p50, %p51
    %p53 = scmp.ne.s32.totalorder %s45, %s47
    %p54 = scmp.eq.s32.totalorder %s16, 1
    %p55 = por %p53, %p54
    %p56 = scmp.ne.s32.totalorder %s47, %s48
    %p57 = scmp.eq.s32.totalorder %s16, 0
    %p58 = por %p56, %p57
    %p59 = scmp.ne.s32.totalorder %s47, %s48
    %p60 = scmp.eq.s32.totalorder %s17, 1
    %p61 = por %p59, %p60
    %p63 = scmp.ne.s32.totalorder %s48, %s62
    %p64 = scmp.eq.s32.totalorder %s17, 0
    %p65 = por %p63, %p64
    %s66 = ssub.s32 %s11, %s18
    %p67 = scmp.eq.s32.totalorder %s66, 0
    %s69 = sadd.s32 %s68, 1
    %s70 = scalar_select %p67, %s68, %s69
    %p73 = pneg %p67
    %p74 = scmp.eq.s32.totalorder %s11, 1
    %p75 = por %p73, %p74
    %p76 = scmp.ne.s32.totalorder %s68, %s71
    %p77 = scmp.eq.s32.totalorder %s11, 0
    %p78 = por %p76, %p77
    %p79 = scmp.ne.s32.totalorder %s68, %s71
    %p80 = scmp.eq.s32.totalorder %s16, 1
    %p81 = por %p79, %p80
    %p82 = scmp.ne.s32.totalorder %s71, %s72
    %p83 = scmp.eq.s32.totalorder %s16, 0
    %p84 = por %p82, %p83
    %p85 = scmp.ne.s32.totalorder %s71, %s72
    %p86 = scmp.eq.s32.totalorder %s17, 1
    %p87 = por %p85, %p86
    %p89 = scmp.ne.s32.totalorder %s72, %s88
    %p90 = scmp.eq.s32.totalorder %s17, 0
    %p91 = por %p89, %p90
    %s92 = ssub.s32 %s11, %s18
    %p93 = scmp.eq.s32.totalorder %s92, 0
    %s95 = sadd.s32 %s94, 1
    %s96 = scalar_select %p93, %s94, %s95
    %p99 = pneg %p93
    %p100 = scmp.eq.s32.totalorder %s11, 1
    %p101 = por %p99, %p100
    %p102 = scmp.ne.s32.totalorder %s94, %s97
    %p103 = scmp.eq.s32.totalorder %s11, 0
    %p104 = por %p102, %p103
    %p105 = scmp.ne.s32.totalorder %s94, %s97
    %p106 = scmp.eq.s32.totalorder %s16, 1
    %p107 = por %p105, %p106
    %p108 = scmp.ne.s32.totalorder %s97, %s98
    %p109 = scmp.eq.s32.totalorder %s16, 0
    %p110 = por %p108, %p109
    %p111 = scmp.ne.s32.totalorder %s97, %s98
    %p112 = scmp.eq.s32.totalorder %s17, 1
    %p113 = por %p111, %p112
    %p115 = scmp.ne.s32.totalorder %s98, %s114
    %p116 = scmp.eq.s32.totalorder %s17, 0
    %p117 = por %p115, %p116
    %s118 = ssub.s32 %s11, %s18
    %p119 = scmp.eq.s32.totalorder %s118, 0
    %s121 = sadd.s32 %s120, 1
    %s122 = scalar_select %p119, %s120, %s121
    %p125 = pneg %p119
    %p126 = scmp.eq.s32.totalorder %s11, 1
    %p127 = por %p125, %p126
    %p128 = scmp.ne.s32.totalorder %s120, %s123
    %p129 = scmp.eq.s32.totalorder %s11, 0
    %p130 = por %p128, %p129
    %p131 = scmp.ne.s32.totalorder %s120, %s123
    %p132 = scmp.eq.s32.totalorder %s16, 1
    %p133 = por %p131, %p132
    %p134 = scmp.ne.s32.totalorder %s123, %s124
    %p135 = scmp.eq.s32.totalorder %s16, 0
    %p136 = por %p134, %p135
    %p137 = scmp.ne.s32.totalorder %s123, %s124
    %p138 = scmp.eq.s32.totalorder %s17, 1
    %p139 = por %p137, %p138
    %p141 = scmp.ne.s32.totalorder %s124, %s140
    %p142 = scmp.eq.s32.totalorder %s17, 0
    %p143 = por %p141, %p142
    %p144 = scmp.le.s32.totalorder 1, %s11
    %p145 = scmp.lt.s32.totalorder %s11, 3
    %p146 = pnand %p144, %p145
    %p147 = pneg %p146
    // Predicated region
    $region9: #{conv_norm_forward.2} parent=5 // pred_check
      _
    $region10: #{conv_norm_forward.2} parent=5 // pred_check_branch
      %149 = sbr.rel (%p146) target = $region12
    $region11: #{conv_norm_forward.2} parent=5 // pred_region
      %s150 = ssub.s32 %s11, 1
      // Predicated region
      $region13: #{conv_norm_forward.2} parent=11 // pred_check
        %p151 = pneg %p58
      $region14: #{conv_norm_forward.2} parent=11 // pred_check_branch
        %153 = sbr.rel (%p151) target = $region16
      $region15: #{conv_norm_forward.2} parent=11 // pred_region
        _
      $region16: #{conv_norm_forward.2} parent=11 // pred_fallthru
        _
    $region12: #{conv_norm_forward.2} parent=5 // pred_fallthru
      _
    %p154 = scmp.lt.s32.totalorder %s11, 2
    // Predicated region
    $region17: #{conv_norm_forward.2} parent=5 // pred_check
      %p155 = pneg %p154
    $region18: #{conv_norm_forward.2} parent=5 // pred_check_branch
      %157 = sbr.rel (%p155) target = $region20
    $region19: #{conv_norm_forward.2} parent=5 // pred_region
      // Predicated region
      $region21: #{conv_norm_forward.2} parent=19 // pred_check
        %p158 = pneg %p31
      $region22: #{conv_norm_forward.2} parent=19 // pred_check_branch
        %160 = sbr.rel (%p158) target = $region24
      $region23: #{conv_norm_forward.2} parent=19 // pred_region
        %p161 = scmp.lt.s32.totalorder %s11, 1
        %s162 = scalar_select %p161, %s11, 1
        %s163 = smul.addr %s162, 3
        %s164 = smul.addr %s163, 4
        %s165 = scalar_lea.vmem %s0, %s164
      $region24: #{conv_norm_forward.2} parent=19 // pred_fallthru
        _
    $region20: #{conv_norm_forward.2} parent=5 // pred_fallthru
      _
    %p166 = scmp.le.s32.totalorder 1, %s11
    %p167 = scmp.lt.s32.totalorder %s11, 3
    %p168 = pnand %p166, %p167
    %p169 = pneg %p168
    // Predicated region
    $region25: #{conv_norm_forward.2} parent=5 // pred_check
      _
    $region26: #{conv_norm_forward.2} parent=5 // pred_check_branch
      %171 = sbr.rel (%p168) target = $region28
    $region27: #{conv_norm_forward.2} parent=5 // pred_region
      %s172 = ssub.s32 %s11, 1
      %p173 = scmp.lt.s32.totalorder %s16, 1
      %s174 = scalar_select %p173, %s16, 1
      %s175 = smul.addr %s174, 3
      %s176 = smul.addr %s175, 4
      %s177 = scalar_lea.vmem %s0, %s176
      %p178 = pneg %p37
      %p179 = pneg %p34
      %p180 = pneg %p58
      %p181 = pneg %p55
      %p182 = pneg %p84
      %p183 = pneg %p81
      %p184 = scmp.lt.s32.totalorder %s16, 1
      %s185 = scalar_select %p184, %s16, 1
      %s186 = smul.addr %s185, 2
      %s187 = smul.addr %s186, 8
      %s188 = scalar_lea.vmem %s2, %s187
      %p189 = pneg %p110
      %p190 = pneg %p107
      %p191 = scmp.lt.s32.totalorder %s16, 1
      %s192 = scalar_select %p191, %s16, 1
      %s193 = scalar_lea.vmem %s3, %s192
      %p194 = pneg %p136
      %p195 = pneg %p133
      %p196 = scmp.lt.s32.totalorder %s16, 1
      %s197 = scalar_select %p196, %s16, 1
      %s198 = scalar_lea.vmem %s4, %s197
      %p199 = scmp.lt.s32.totalorder %s16, 1
      %s200 = scalar_select %p199, %s16, 1
      %s201 = smul.addr %s200, 3
      %s202 = smul.addr %s201, 4
      %s203 = scalar_lea.vmem %s0, %s202
      %p204 = scmp.lt.s32.totalorder %s16, 1
      %s205 = scalar_select %p204, %s16, 1
      %s206 = smul.addr %s205, 2
      %s207 = smul.addr %s206, 8
      %s208 = scalar_lea.vmem %s2, %s207
      %p209 = scmp.lt.s32.totalorder %s16, 1
      %s210 = scalar_select %p209, %s16, 1
      %s211 = scalar_lea.vmem %s3, %s210
      %p212 = scmp.lt.s32.totalorder %s16, 1
      %s213 = scalar_select %p212, %s16, 1
      %s214 = scalar_lea.vmem %s4, %s213
      %v216 = vld [vmem:[%s203] sm:$0xf]
      %v217 = vld [vmem:[%s203 + $0x4] sm:$0xf]
      %v218 = vld [vmem:[%s1] sm:$0xf]
      %v219 = vld [vmem:[%s1 + $0x4] sm:$0xf]
      %v220 = vld [vmem:[%s1 + $0x8] sm:$0xf]
      %v221 = vld [vmem:[%s1 + $0xc] sm:$0xf]
      %v222 = vld [vmem:[%s1 + $0x10] sm:$0xf]
      %v223 = vld [vmem:[%s1 + $0x14] sm:$0xf]
      %v224 = vld [vmem:[%s1 + $0x18] sm:$0xf]
      %v225 = vld [vmem:[%s1 + $0x1c] sm:$0xf]
      %v226 = vld [vmem:[%s1 + $0x20] sm:$0xf]
      %v227 = vld [vmem:[%s203 + $0x8] sm:$0x1]
      %s228 = scalar_lea.vmem %s1, 36
      %v229 = vld [vmem:[%s228] sm:$0xf]
      %v230 = vld [vmem:[%s228 + $0x4] sm:$0xf]
      %v231 = vld [vmem:[%s228 + $0x8] sm:$0xf]
      %v232 = vld [vmem:[%s228 + $0xc] sm:$0xf]
      %v233 = vld [vmem:[%s228 + $0x10] sm:$0xf]
      %v234 = vld [vmem:[%s228 + $0x14] sm:$0xf]
      %v235 = vld [vmem:[%s228 + $0x18] sm:$0xf]
      %v236 = vld [vmem:[%s228 + $0x1c] sm:$0xf]
      %v237 = vld [vmem:[%s228 + $0x20] sm:$0xf]
      %v241 = vunpack.c.l.b16 %v216
      %v242 = vunpack.c.l.b16 %v217
      %v243 = vunpack.c.l.b16 %v227
      %v244 = vpack.c.b16 %v242, %v241
      %v245 = vpack.c.b16 %v243, %v243
      %vm246 = vsmask.f32 7424
      %v248 = vshrl.u32 %v244, 16
      %v250 = vshll.u32 %v244, 16
      %v252 = vrot.slane %v250, 1
      %v253 = vor.u32 %v248, %v252
      %v255 = vshll.u32 %v245, 16
      %v257 = vrot.slane %v255, 1
      %v258 = vsel %vm246, %v253, %v257
      %v268 = vunpack.c.l.b16 %v229
      %v269 = vunpack.c.l.b16 %v230
      %v270 = vunpack.c.l.b16 %v231
      %v271 = vunpack.c.l.b16 %v232
      %v272 = vunpack.c.l.b16 %v233
      %v273 = vunpack.c.l.b16 %v234
      %v274 = vunpack.c.l.b16 %v235
      %v275 = vunpack.c.l.b16 %v236
      %v276 = vunpack.c.l.b16 %v237
      %v277 = vpack.c.b16 %v269, %v268
      %v278 = vpack.c.b16 %v271, %v270
      %v279 = vpack.c.b16 %v273, %v272
      %v280 = vpack.c.b16 %v275, %v274
      %v281 = vpack.c.b16 %v276, %v276
      %vm286 = vcmask 588800
      %v288 = vsel %vm286, %v258, 0
      %vm290 = vcmask 1043456
      %v292 = vsel %vm290, %v281, 0
      %294 = vmatprep.subr.bf16.mxu0 0
      %295 = vmatpush1.bf16.msra.mxu0 %v277
      %296 = vmatprep.subr.bf16.mxu0 0
      %297 = vmatpush1.bf16.msra.mxu0 %v278
      %298 = vmatprep.subr.bf16.mxu0 0
      %299 = vmatpush1.bf16.msra.mxu0 %v279
      %300 = vmatprep.subr.bf16.mxu0 0
      %301 = vmatpush1.bf16.msra.mxu0 %v280
      %302 = vmatprep.subr.bf16.mxu0 0
      %303 = vmatpush1.bf16.msra.mxu0 %v292
      %304 = vmatprep.subr.bf16.mxu0 0
      %305 = vmatpush1.bf16.msra.mxu0 0
      %306 = vmatprep.subr.bf16.mxu0 0
      %307 = vmatpush1.bf16.msra.mxu0 0
      %308 = vmatprep.subr.bf16.mxu0 0
      %309 = vmatpush1.bf16.msra.mxu0 0
      %310 = vmatprep.subr.bf16.mxu0 0
      %311 = vmatpush1.bf16.msra.mxu0 0
      %312 = vmatprep.subr.bf16.mxu0 0
      %313 = vmatpush1.bf16.msra.mxu0 0
      %314 = vmatprep.subr.bf16.mxu0 0
      %315 = vmatpush1.bf16.msra.mxu0 0
      %316 = vmatprep.subr.bf16.mxu0 0
      %317 = vmatpush1.bf16.msra.mxu0 0
      %318 = vmatprep.subr.bf16.mxu0 0
      %319 = vmatpush1.bf16.msra.mxu0 0
      %320 = vmatprep.subr.bf16.mxu0 0
      %321 = vmatpush1.bf16.msra.mxu0 0
      %322 = vmatprep.subr.bf16.mxu0 0
      %323 = vmatpush1.bf16.msra.mxu0 0
      %324 = vmatprep.subr.bf16.mxu0 0
      %325 = vmatpush1.bf16.msra.mxu0 0
      %326 = vmatprep.mubr.bf16.mxu0 0
      %327 = vmatmul.mubr.bf16.gmra.mrb[0].mxu0 %v288
      %v328 = vpop.f32.mrb[0].mxu0
      %v329 = vadd.f32 0.0, %v328
      %v330 = vpop.f32.mrb[0].mxu0
      %v331 = vpop.f32.mrb[0].mxu0
      %v332 = vadd.f32 0.0, %v331
      %v333 = vpop.f32.mrb[0].mxu0
      %334 = vdwg.mxu0
      %v344 = vunpack.c.l.b16 %v218
      %v345 = vunpack.c.l.b16 %v219
      %v346 = vunpack.c.l.b16 %v220
      %v347 = vunpack.c.l.b16 %v221
      %v348 = vunpack.c.l.b16 %v222
      %v349 = vunpack.c.l.b16 %v223
      %v350 = vunpack.c.l.b16 %v224
      %v351 = vunpack.c.l.b16 %v225
      %v352 = vunpack.c.l.b16 %v226
      %v353 = vpack.c.b16 %v345, %v344
      %v354 = vpack.c.b16 %v347, %v346
      %v355 = vpack.c.b16 %v349, %v348
      %v356 = vpack.c.b16 %v351, %v350
      %v357 = vpack.c.b16 %v352, %v352
      %v362 = vsel %vm286, %v244, 0
      %v365 = vsel %vm290, %v357, 0
      %367 = vmatprep.subr.bf16.mxu0 0
      %368 = vmatpush1.bf16.msra.mxu0 %v353
      %369 = vmatprep.subr.bf16.mxu0 0
      %370 = vmatpush1.bf16.msra.mxu0 %v354
      %371 = vmatprep.subr.bf16.mxu0 0
      %372 = vmatpush1.bf16.msra.mxu0 %v355
      %373 = vmatprep.subr.bf16.mxu0 0
      %374 = vmatpush1.bf16.msra.mxu0 %v356
      %375 = vmatprep.subr.bf16.mxu0 0
      %376 = vmatpush1.bf16.msra.mxu0 %v365
      %377 = vmatprep.subr.bf16.mxu0 0
      %378 = vmatpush1.bf16.msra.mxu0 0
      %379 = vmatprep.subr.bf16.mxu0 0
      %380 = vmatpush1.bf16.msra.mxu0 0
      %381 = vmatprep.subr.bf16.mxu0 0
      %382 = vmatpush1.bf16.msra.mxu0 0
      %383 = vmatprep.subr.bf16.mxu0 0
      %384 = vmatpush1.bf16.msra.mxu0 0
      %385 = vmatprep.subr.bf16.mxu0 0
      %386 = vmatpush1.bf16.msra.mxu0 0
      %387 = vmatprep.subr.bf16.mxu0 0
      %388 = vmatpush1.bf16.msra.mxu0 0
      %389 = vmatprep.subr.bf16.mxu0 0
      %390 = vmatpush1.bf16.msra.mxu0 0
      %391 = vmatprep.subr.bf16.mxu0 0
      %392 = vmatpush1.bf16.msra.mxu0 0
      %393 = vmatprep.subr.bf16.mxu0 0
      %394 = vmatpush1.bf16.msra.mxu0 0
      %395 = vmatprep.subr.bf16.mxu0 0
      %396 = vmatpush1.bf16.msra.mxu0 0
      %397 = vmatprep.subr.bf16.mxu0 0
      %398 = vmatpush1.bf16.msra.mxu0 0
      %399 = vmatprep.mubr.bf16.mxu0 0
      %400 = vmatmul.mubr.bf16.gmra.mrb[0].mxu0 %v362
      %v401 = vpop.f32.mrb[0].mxu0
      %v402 = vadd.f32 %v329, %v401
      %v403 = vpop.f32.mrb[0].mxu0
      %v404 = vpop.f32.mrb[0].mxu0
      %v405 = vadd.f32 %v332, %v404
      %v406 = vpop.f32.mrb[0].mxu0
      %407 = vdwg.mxu0
      %v408 = vld [vmem:[%s203] sm:$0xe]
      %s409 = scalar_lea.vmem %s1, 72
      %v410 = vld [vmem:[%s409] sm:$0xf]
      %v411 = vld [vmem:[%s409 + $0x4] sm:$0xf]
      %v412 = vld [vmem:[%s409 + $0x8] sm:$0xf]
      %v413 = vld [vmem:[%s409 + $0xc] sm:$0xf]
      %v414 = vld [vmem:[%s409 + $0x10] sm:$0xf]
      %v415 = vld [vmem:[%s409 + $0x14] sm:$0xf]
      %v416 = vld [vmem:[%s409 + $0x18] sm:$0xf]
      %v417 = vld [vmem:[%s409 + $0x1c] sm:$0xf]
      %v418 = vld [vmem:[%s409 + $0x20] sm:$0xf]
      %v420 = vunpack.c.l.b16 %v408
      %v421 = vpack.c.b16 %v242, %v420
      %vm422 = vcmask 1046528
      %v423 = vrot.slane %v421, 1
      %v424 = vrot.slane %v245, 1
      %v425 = vsel %vm422, %v423, %v424
      %v435 = vunpack.c.l.b16 %v410
      %v436 = vunpack.c.l.b16 %v411
      %v437 = vunpack.c.l.b16 %v412
      %v438 = vunpack.c.l.b16 %v413
      %v439 = vunpack.c.l.b16 %v414
      %v440 = vunpack.c.l.b16 %v415
      %v441 = vunpack.c.l.b16 %v416
      %v442 = vunpack.c.l.b16 %v417
      %v443 = vunpack.c.l.b16 %v418
      %v444 = vpack.c.b16 %v436, %v435
      %v445 = vpack.c.b16 %v438, %v437
      %v446 = vpack.c.b16 %v440, %v439
      %v447 = vpack.c.b16 %v442, %v441
      %v448 = vpack.c.b16 %v443, %v443
      %v454 = vsel %vm286, %v425, 0
      %v457 = vsel %vm290, %v448, 0
      %459 = vmatprep.subr.bf16.mxu0 0
      %460 = vmatpush1.bf16.msra.mxu0 %v444
      %461 = vmatprep.subr.bf16.mxu0 0
      %462 = vmatpush1.bf16.msra.mxu0 %v445
      %463 = vmatprep.subr.bf16.mxu0 0
      %464 = vmatpush1.bf16.msra.mxu0 %v446
      %465 = vmatprep.subr.bf16.mxu0 0
      %466 = vmatpush1.bf16.msra.mxu0 %v447
      %467 = vmatprep.subr.bf16.mxu0 0
      %468 = vmatpush1.bf16.msra.mxu0 %v457
      %469 = vmatprep.subr.bf16.mxu0 0
      %470 = vmatpush1.bf16.msra.mxu0 0
      %471 = vmatprep.subr.bf16.mxu0 0
      %472 = vmatpush1.bf16.msra.mxu0 0
      %473 = vmatprep.subr.bf16.mxu0 0
      %474 = vmatpush1.bf16.msra.mxu0 0
      %475 = vmatprep.subr.bf16.mxu0 0
      %476 = vmatpush1.bf16.msra.mxu0 0
      %477 = vmatprep.subr.bf16.mxu0 0
      %478 = vmatpush1.bf16.msra.mxu0 0
      %479 = vmatprep.subr.bf16.mxu0 0
      %480 = vmatpush1.bf16.msra.mxu0 0
      %481 = vmatprep.subr.bf16.mxu0 0
      %482 = vmatpush1.bf16.msra.mxu0 0
      %483 = vmatprep.subr.bf16.mxu0 0
      %484 = vmatpush1.bf16.msra.mxu0 0
      %485 = vmatprep.subr.bf16.mxu0 0
      %486 = vmatpush1.bf16.msra.mxu0 0
      %487 = vmatprep.subr.bf16.mxu0 0
      %488 = vmatpush1.bf16.msra.mxu0 0
      %489 = vmatprep.subr.bf16.mxu0 0
      %490 = vmatpush1.bf16.msra.mxu0 0
      %491 = vmatprep.mubr.bf16.mxu0 0
      %492 = vmatmul.mubr.bf16.gmra.mrb[0].mxu0 %v454
      %v493 = vpop.f32.mrb[0].mxu0
      %v494 = vadd.f32 0.0, %v493
      %v495 = vpop.f32.mrb[0].mxu0
      %v496 = vpop.f32.mrb[0].mxu0
      %v497 = vadd.f32 0.0, %v496
      %v498 = vpop.f32.mrb[0].mxu0
      %499 = vdwg.mxu0
      %v500 = vadd.f32 %v402, %v494
      %v501 = vadd.f32 %v405, %v497
      %502 = vst [vmem:[%s208] sm:$0xff] %v500
      %503 = vst [vmem:[%s208 + $0x8] sm:$0xff] %v501
      %v504 = vadd.f32 %v500, %v501
      %v505 = vrot.slane %v504, 4
      %v506 = vadd.f32 %v504, %v505
      %v507 = vrot.slane %v506, 2
      %v508 = vadd.f32 %v506, %v507
      %v509 = vrot.slane %v508, 1
      %v510 = vadd.f32 %v508, %v509
      %511 = vst [vmem:[%s211] sm:$0x1] %v510
      %v512 = vmul.f32 %v500, %v500
      %v513 = vmul.f32 %v501, %v501
      %v514 = vadd.f32 %v512, %v513
      %v515 = vrot.slane %v514, 4
      %v516 = vadd.f32 %v514, %v515
      %v517 = vrot.slane %v516, 2
      %v518 = vadd.f32 %v516, %v517
      %v519 = vrot.slane %v518, 1
      %v520 = vadd.f32 %v518, %v519
      %521 = vst [vmem:[%s214] sm:$0x1] %v520
      %p522 = scmp.lt.s32.totalorder %s16, 1
      %s523 = scalar_select %p522, %s16, 1
      %s524 = smul.addr %s523, 2
      %s525 = smul.addr %s524, 8
      %s526 = scalar_lea.vmem %s2, %s525
      %p527 = scmp.lt.s32.totalorder %s16, 1
      %s528 = scalar_select %p527, %s16, 1
      %s529 = scalar_lea.vmem %s3, %s528
      %p530 = scmp.lt.s32.totalorder %s16, 1
      %s531 = scalar_select %p530, %s16, 1
      %s532 = scalar_lea.vmem %s4, %s531
      // Predicated region
      $region29: #{conv_norm_forward.2} parent=27 // pred_check
        %p533 = pneg %p81
      $region30: #{conv_norm_forward.2} parent=27 // pred_check_branch
        %535 = sbr.rel (%p533) target = $region32
      $region31: #{conv_norm_forward.2} parent=27 // pred_region
        _
      $region32: #{conv_norm_forward.2} parent=27 // pred_fallthru
        _
      // Predicated region
      $region33: #{conv_norm_forward.2} parent=27 // pred_check
        %p536 = pneg %p107
      $region34: #{conv_norm_forward.2} parent=27 // pred_check_branch
        %538 = sbr.rel (%p536) target = $region36
      $region35: #{conv_norm_forward.2} parent=27 // pred_region
        _
      $region36: #{conv_norm_forward.2} parent=27 // pred_fallthru
        _
      // Predicated region
      $region37: #{conv_norm_forward.2} parent=27 // pred_check
        %p539 = pneg %p133
      $region38: #{conv_norm_forward.2} parent=27 // pred_check_branch
        %541 = sbr.rel (%p539) target = $region40
      $region39: #{conv_norm_forward.2} parent=27 // pred_region
        _
      $region40: #{conv_norm_forward.2} parent=27 // pred_fallthru
        _
    $region28: #{conv_norm_forward.2} parent=5 // pred_fallthru
      _
    %p542 = scmp.le.s32.totalorder 2, %s11
    // Predicated region
    $region41: #{conv_norm_forward.2} parent=5 // pred_check
      %p543 = pneg %p542
    $region42: #{conv_norm_forward.2} parent=5 // pred_check_branch
      %545 = sbr.rel (%p543) target = $region44
    $region43: #{conv_norm_forward.2} parent=5 // pred_region
      %s546 = ssub.s32 %s11, 2
      // Predicated region
      $region45: #{conv_norm_forward.2} parent=43 // pred_check
        %p547 = pneg %p87
      $region46: #{conv_norm_forward.2} parent=43 // pred_check_branch
        %549 = sbr.rel (%p547) target = $region48
      $region47: #{conv_norm_forward.2} parent=43 // pred_region
        %p550 = scmp.lt.s32.totalorder %s17, 1
        %s551 = scalar_select %p550, %s17, 1
        %s552 = smul.addr %s551, 2
        %s553 = smul.addr %s552, 8
        %s554 = scalar_lea.vmem %s2, %s553
      $region48: #{conv_norm_forward.2} parent=43 // pred_fallthru
        _
      // Predicated region
      $region49: #{conv_norm_forward.2} parent=43 // pred_check
        %p555 = pneg %p113
      $region50: #{conv_norm_forward.2} parent=43 // pred_check_branch
        %557 = sbr.rel (%p555) target = $region52
      $region51: #{conv_norm_forward.2} parent=43 // pred_region
        %p558 = scmp.lt.s32.totalorder %s17, 1
        %s559 = scalar_select %p558, %s17, 1
        %s560 = scalar_lea.vmem %s3, %s559
      $region52: #{conv_norm_forward.2} parent=43 // pred_fallthru
        _
      // Predicated region
      $region53: #{conv_norm_forward.2} parent=43 // pred_check
        %p561 = pneg %p139
      $region54: #{conv_norm_forward.2} parent=43 // pred_check_branch
        %563 = sbr.rel (%p561) target = $region56
      $region55: #{conv_norm_forward.2} parent=43 // pred_region
        %p564 = scmp.lt.s32.totalorder %s17, 1
        %s565 = scalar_select %p564, %s17, 1
        %s566 = scalar_lea.vmem %s4, %s565
      $region56: #{conv_norm_forward.2} parent=43 // pred_fallthru
        _
    $region44: #{conv_norm_forward.2} parent=5 // pred_fallthru
      _
  $region6: #{conv_norm_forward.2} parent=0 // loop_footer
    %s15 = sadd.s32 1, %s11
  $region7: #{conv_norm_forward.2} parent=0 // loop_footer_branch
    %10 = sbr.rel target = $region3
  $region8: #{conv_norm_forward.2} parent=0 // loop_exit
    _

// kernel: tile.13
$region0: #{tile.13}
  #allocation0 [shape = 's32[1]{0}', space=sflag, size = 0x4, scoped, tag = 'scoped memory for tile.13']
  %s0 = inlined_call_operand.vmem [shape: f32[8], index: 0, kind: input, shape index: {}]
  %s1 = inlined_call_operand.vmem [shape: f32[16,8], index: 1, kind: output, shape index: {}]
  // Predicated region
  $region2: #{tile.13} parent=0 // pred_check
    _
  $region3: #{tile.13} parent=0 // pred_check_branch
    %3 = sbr.rel (0) target = $region5
  $region4: #{tile.13} parent=0 // pred_region
    _
  $region5: #{tile.13} parent=0 // pred_fallthru
    _
  %v4 = vld [vmem:[%s0] ss:$0 sm:$0xff]
  %5 = vst [vmem:[%s1] sm:$0xff] %v4
  %s6 = scalar_lea.vmem %s1, 8
  %7 = vst [vmem:[%s6] sm:$0xff] %v4

// kernel: tile.14
$region0: #{tile.14}
  %s0 = inlined_call_operand.vmem [shape: f32[16,8], index: 0, kind: input, shape index: {}]
  %s1 = inlined_call_operand.vmem [shape: f32[1,128], index: 1, kind: output, shape index: {}]
  $region1: #{tile.14} parent=0
    #allocation0 [shape = 'u8[4096]{0}', space=vmem, size = 0x1000, scoped, tag = 'scoped mem for output reshape']
    %v2 = vld [vmem:[%s0] sm:$0x1]
    %vm3 = vcmask 64512
    %4 = vst.msk [vmem:[#allocation0] sm:$0x1] %vm3, %v2
    %s5 = scalar_lea.vmem %s0, 15
    %v6 = vld [vmem:[%s5] sm:$0x1]
    %7 = vrot.lane.b32.xlu0 %v6, 120
    %v8 = vpop.permute.xlu0 %7
    %vm9 = vcmask 1048512
    %10 = vst.msk [vmem:[#allocation0] sm:$0x1] %vm9, %v8
    %s11 = scalar_lea.vmem %s0, 14
    %v12 = vld [vmem:[%s11] sm:$0x1]
    %13 = vrot.lane.b32.xlu0 %v12, 112
    %v14 = vpop.permute.xlu0 %13
    %vm15 = vcmask 982912
    %16 = vst.msk [vmem:[#allocation0] sm:$0x1] %vm15, %v14
    %s17 = scalar_lea.vmem %s0, 13
    %v18 = vld [vmem:[%s17] sm:$0x1]
    %19 = vrot.lane.b32.xlu0 %v18, 104
    %v20 = vpop.permute.xlu0 %19
    %vm21 = vcmask 917312
    %22 = vst.msk [vmem:[#allocation0] sm:$0x1] %vm21, %v20
    %s23 = scalar_lea.vmem %s0, 12
    %v24 = vld [vmem:[%s23] sm:$0x1]
    %25 = vrot.lane.b32.xlu0 %v24, 96
    %v26 = vpop.permute.xlu0 %25
    %vm27 = vcmask 851712
    %28 = vst.msk [vmem:[#allocation0] sm:$0x1] %vm27, %v26
    %s29 = scalar_lea.vmem %s0, 11
    %v30 = vld [vmem:[%s29] sm:$0x1]
    %31 = vrot.lane.b32.xlu0 %v30, 88
    %v32 = vpop.permute.xlu0 %31
    %vm33 = vcmask 786112
    %34 = vst.msk [vmem:[#allocation0] sm:$0x1] %vm33, %v32
    %s35 = scalar_lea.vmem %s0, 10
    %v36 = vld [vmem:[%s35] sm:$0x1]
    %37 = vrot.lane.b32.xlu0 %v36, 80
    %v38 = vpop.permute.xlu0 %37
    %vm39 = vcmask 720512
    %40 = vst.msk [vmem:[#allocation0] sm:$0x1] %vm39, %v38
    %s41 = scalar_lea.vmem %s0, 9
    %v42 = vld [vmem:[%s41] sm:$0x1]
    %43 = vrot.lane.b32.xlu0 %v42, 72
    %v44 = vpop.permute.xlu0 %43
    %vm45 = vcmask 654912
    %46 = vst.msk [vmem:[#allocation0] sm:$0x1] %vm45, %v44
    %s47 = scalar_lea.vmem %s0, 8
    %v48 = vld [vmem:[%s47] sm:$0x1]
    %49 = vrot.lane.b32.xlu0 %v48, 64
    %v50 = vpop.permute.xlu0 %49
    %vm51 = vcmask 589312
    %52 = vst.msk [vmem:[#allocation0] sm:$0x1] %vm51, %v50
    %s53 = scalar_lea.vmem %s0, 7
    %v54 = vld [vmem:[%s53] sm:$0x1]
    %55 = vrot.lane.b32.xlu0 %v54, 56
    %v56 = vpop.permute.xlu0 %55
    %vm57 = vcmask 523712
    %58 = vst.msk [vmem:[#allocation0] sm:$0x1] %vm57, %v56
    %s59 = scalar_lea.vmem %s0, 6
    %v60 = vld [vmem:[%s59] sm:$0x1]
    %61 = vrot.lane.b32.xlu0 %v60, 48
    %v62 = vpop.permute.xlu0 %61
    %vm63 = vcmask 458112
    %64 = vst.msk [vmem:[#allocation0] sm:$0x1] %vm63, %v62
    %s65 = scalar_lea.vmem %s0, 5
    %v66 = vld [vmem:[%s65] sm:$0x1]
    %67 = vrot.lane.b32.xlu0 %v66, 40
    %v68 = vpop.permute.xlu0 %67
    %vm69 = vcmask 392512
    %70 = vst.msk [vmem:[#allocation0] sm:$0x1] %vm69, %v68
    %s71 = scalar_lea.vmem %s0, 4
    %v72 = vld [vmem:[%s71] sm:$0x1]
    %73 = vrot.lane.b32.xlu0 %v72, 32
    %v74 = vpop.permute.xlu0 %73
    %vm75 = vcmask 326912
    %76 = vst.msk [vmem:[#allocation0] sm:$0x1] %vm75, %v74
    %s77 = scalar_lea.vmem %s0, 3
    %v78 = vld [vmem:[%s77] sm:$0x1]
    %79 = vrot.lane.b32.xlu0 %v78, 24
    %v80 = vpop.permute.xlu0 %79
    %vm81 = vcmask 261312
    %82 = vst.msk [vmem:[#allocation0] sm:$0x1] %vm81, %v80
    %s83 = scalar_lea.vmem %s0, 2
    %v84 = vld [vmem:[%s83] sm:$0x1]
    %85 = vrot.lane.b32.xlu0 %v84, 16
    %v86 = vpop.permute.xlu0 %85
    %vm87 = vcmask 195712
    %88 = vst.msk [vmem:[#allocation0] sm:$0x1] %vm87, %v86
    %s89 = scalar_lea.vmem %s0, 1
    %v90 = vld [vmem:[%s89] sm:$0x1]
    %91 = vrot.lane.b32.xlu0 %v90, 8
    %v92 = vpop.permute.xlu0 %91
    %vm93 = vcmask 130112
    %94 = vst.msk [vmem:[#allocation0] sm:$0x1] %vm93, %v92
    %s96 = sshllo.u32 0, 1
    %v98 = vld [vmem:[#allocation0] sm:%s96]
    %s99 = sshllo.u32 0, 1
    %100 = vst [vmem:[%s1] sm:%s99] %v98

// kernel: conv_norm_forward.3
$region0: #{conv_norm_forward.3}
  #allocation0 [shape = 'u32[]', space=smem, size = 0x4, offset = 0x4, fixed_abs, tag = 'smem constant byte address 0x4 - core index']
  #allocation1 [shape = 'u32[144,128]{1,0:T(1,128)}', space=vmem, size = 0x12000, scoped, tag = 'internal scratch']
  %s0 = inlined_call_operand.vmem [shape: f32[32,128], index: 0, kind: input, shape index: {}]
  %s1 = inlined_call_operand.vmem [shape: f32[1,128], index: 1, kind: input, shape index: {}]
  %s2 = inlined_call_operand.vmem [shape: f32[1,128], index: 2, kind: input, shape index: {}]
  %s3 = inlined_call_operand.vmem [shape: f32[32,128], index: 3, kind: output, shape index: {}]
  %s4 = sld [smem:[#allocation0]]
  $region22: #{conv_norm_forward.3} parent=0
    _
  %s6 = ssub.s32 1, %s4
  %s7 = scalar_select 0, %s6, %s4
  // Predicated region
  $region2: #{conv_norm_forward.3} parent=0 // pred_check
    _
  $region3: #{conv_norm_forward.3} parent=0 // pred_check_branch
    %9 = sbr.rel (0) target = $region5
  $region4: #{conv_norm_forward.3} parent=0 // pred_region
    _
  $region5: #{conv_norm_forward.3} parent=0 // pred_fallthru
    _
  // Predicated region
  $region6: #{conv_norm_forward.3} parent=0 // pred_check
    _
  $region7: #{conv_norm_forward.3} parent=0 // pred_check_branch
    %11 = sbr.rel (0) target = $region9
  $region8: #{conv_norm_forward.3} parent=0 // pred_region
    _
  $region9: #{conv_norm_forward.3} parent=0 // pred_fallthru
    _
  // Predicated region
  $region10: #{conv_norm_forward.3} parent=0 // pred_check
    _
  $region11: #{conv_norm_forward.3} parent=0 // pred_check_branch
    %13 = sbr.rel (0) target = $region13
  $region12: #{conv_norm_forward.3} parent=0 // pred_region
    _
  $region13: #{conv_norm_forward.3} parent=0 // pred_fallthru
    _
  %v14 = vld [vmem:[%s0] sm:$0xff]
  %v15 = vld [vmem:[%s0 + $0x8] sm:$0xff]
  %v16 = vld [vmem:[%s0 + $0x10] sm:$0xff]
  %v17 = vld [vmem:[%s0 + $0x18] sm:$0xff]
  %v18 = vld [vmem:[%s1] sm:$0x1]
  %v20 = vlaneseq
  %v21 = vshrl.u32 %v20, 7
  %v22 = vsub.s32 0, %v21
  %v23 = vrot.slane %v18, %v22
  %v25 = vmul.f32 %v14, %v23
  %v26 = vmul.f32 %v15, %v23
  %v27 = vmul.f32 %v16, %v23
  %v28 = vmul.f32 %v17, %v23
  %v29 = vld [vmem:[%s2] sm:$0x1]
  %v31 = vlaneseq
  %v32 = vshrl.u32 %v31, 7
  %v33 = vsub.s32 0, %v32
  %v34 = vrot.slane %v29, %v33
  %v36 = vadd.f32 %v25, %v34
  %v37 = vadd.f32 %v26, %v34
  %v38 = vadd.f32 %v27, %v34
  %v39 = vadd.f32 %v28, %v34
  %v40 = vmax.f32 %v36, 0.0
  %v41 = vmax.f32 %v37, 0.0
  %v42 = vmax.f32 %v38, 0.0
  %v43 = vmax.f32 %v39, 0.0
  %v44 = vmin.f32 %v40, 6.0
  %v45 = vmin.f32 %v41, 6.0
  %v46 = vmin.f32 %v42, 6.0
  %v47 = vmin.f32 %v43, 6.0
  %v48 = vmul.f32 %v44, 2.5
  %v49 = vmul.f32 %v45, 2.5
  %v50 = vmul.f32 %v46, 2.5
  %v51 = vmul.f32 %v47, 2.5
  %v52 = vround.ne.pseudo %v48
  %v53 = vround.ne.pseudo %v49
  %v54 = vround.ne.pseudo %v50
  %v55 = vround.ne.pseudo %v51
  %v56 = vmul.f32 %v52, 0.4
  %v57 = vmul.f32 %v53, 0.4
  %v58 = vmul.f32 %v54, 0.4
  %v59 = vmul.f32 %v55, 0.4
  %60 = vst [vmem:[%s3] sm:$0xff] %v56
  %61 = vst [vmem:[%s3 + $0x8] sm:$0xff] %v57
  %62 = vst [vmem:[%s3 + $0x10] sm:$0xff] %v58
  %63 = vst [vmem:[%s3 + $0x18] sm:$0xff] %v59
  // Predicated region
  $region14: #{conv_norm_forward.3} parent=0 // pred_check
    _
  $region15: #{conv_norm_forward.3} parent=0 // pred_check_branch
    %65 = sbr.rel (0) target = $region17
  $region16: #{conv_norm_forward.3} parent=0 // pred_region
    _
  $region17: #{conv_norm_forward.3} parent=0 // pred_fallthru
    _
  // Predicated region
  $region18: #{conv_norm_forward.3} parent=0 // pred_check
    _
  $region19: #{conv_norm_forward.3} parent=0 // pred_check_branch
    %67 = sbr.rel (0) target = $region21
  $region20: #{conv_norm_forward.3} parent=0 // pred_region
    _
  $region21: #{conv_norm_forward.3} parent=0 // pred_fallthru
    _

</llo_original>
